<compile_context>
chip_gen: v7x
topology: tpu7x:2x2x1
jax: 0.10.0
libtpu: 0.0.40
codegen_flags: <defaults>
</compile_context>

<pallas_src>
import functools

import jax
import jax.numpy as jnp
from jax.experimental import pallas as pl
from jax.experimental.pallas import tpu as pltpu


def _bilinear_max_attn_kernel(q_ref, w_ref, b_ref, k_ref, out_ref):
    # q_ref:   (TB, Q)        query tile
    # w_ref:   (K, Q)         nn.Linear weight (key_size, q_size), PyTorch layout
    # b_ref:   (1, K)         nn.Linear bias
    # k_ref:   (N, K)         keys (n_keys, key_size), PyTorch layout
    # out_ref: (TB, N)        attention weights
    contract_last = (((1,), (1,)), ((), ()))

    # Wquery = query @ W.T + b   (MXU, f32 accumulate)
    wq = jax.lax.dot_general(q_ref[...], w_ref[...],
                             dimension_numbers=contract_last,
                             preferred_element_type=jnp.float32)
    wq = wq + b_ref[...]                                   # (TB, K) + (1, K)

    # score = Wquery @ key.T     (MXU, trans_b folded into dot_general)
    score = jax.lax.dot_general(wq, k_ref[...].astype(wq.dtype),
                                dimension_numbers=contract_last,
                                preferred_element_type=jnp.float32)

    # Faithful reproduction of the module's normalization (f32 on VPU/EUP):
    #   exp -> divide by row max of expscore -> divide by row sum.
    expscore = jnp.exp(score)
    alpha = expscore / jnp.max(expscore, axis=1, keepdims=True)
    alpha = alpha / jnp.sum(alpha, axis=1, keepdims=True)
    out_ref[...] = alpha.astype(out_ref.dtype)


@functools.partial(jax.jit, static_argnames=("use_bf16_matmul",))
def bilinear_max_attn_forward(query, key, W, b, *, use_bf16_matmul=False):
    """JAX wrapper reproducing BilinearMaxAttn(q_size, key_size).forward.

    query: (B, q_size)   key: (n_keys, key_size)
    W:     (key_size, q_size)   b: (key_size,)
    returns (B, n_keys) float32
    """
    B, Q = query.shape
    N, K = key.shape
    assert W.shape == (K, Q), (W.shape, (K, Q))

    mxu_dtype = jnp.bfloat16 if use_bf16_matmul else jnp.float32
    q = query.astype(mxu_dtype)
    w = W.astype(mxu_dtype)
    k = key.astype(mxu_dtype)
    b2 = jnp.reshape(b, (1, K)).astype(jnp.float32)

    # Batch tile: full batch for small B; otherwise 512 rows (multiple of 8),
    # sized conservatively against v7x's 64 MiB VMEM with double-buffering.
    TB = B if B <= 512 else 512
    grid = (pl.cdiv(B, TB),)

    out = pl.pallas_call(
        _bilinear_max_attn_kernel,
        out_shape=jax.ShapeDtypeStruct((B, N), jnp.float32),
        grid=grid,
        in_specs=[
            pl.BlockSpec((TB, Q), lambda i: (i, 0)),   # query tile (pipelined)
            pl.BlockSpec((K, Q), lambda i: (0, 0)),    # W resident
            pl.BlockSpec((1, K), lambda i: (0, 0)),    # bias resident
            pl.BlockSpec((N, K), lambda i: (0, 0)),    # keys resident
        ],
        out_specs=pl.BlockSpec((TB, N), lambda i: (i, 0)),
        compiler_params=pltpu.CompilerParams(
            dimension_semantics=("parallel",)),        # batch tiles independent
    )(q, w, b2, k)
    return out


def _reference_forward(query, key, W, b):
    """Pure-JAX reference mirroring the PyTorch module line-by-line."""
    wq = query @ W.T + b                               # Linear
    score = wq @ key.T
    expscore = jnp.exp(score)
    alpha = expscore / jnp.max(expscore, axis=1, keepdims=True)
    alpha = alpha / jnp.sum(alpha, axis=1, keepdims=True)
    return alpha


if __name__ == "__main__":
    BATCH = 4
    Q_SIZE = 32
    KEY_SIZE = 48
    N_KEYS = 16

    root = jax.random.PRNGKey(0)
    k_w, k_b, k_q, k_k = jax.random.split(root, 4)

    # nn.Linear(q_size, key_size) default init: U(-1/sqrt(q_size), 1/sqrt(q_size))
    bound = 1.0 / (Q_SIZE ** 0.5)
    W = jax.random.uniform(k_w, (KEY_SIZE, Q_SIZE), jnp.float32, -bound, bound)
    b = jax.random.uniform(k_b, (KEY_SIZE,), jnp.float32, -bound, bound)

    query = jax.random.normal(k_q, (BATCH, Q_SIZE), jnp.float32)   # batch * query_dim
    key = jax.random.normal(k_k, (N_KEYS, KEY_SIZE), jnp.float32)  # n_keys * key_dim

    out = bilinear_max_attn_forward(query, key, W, b)
    out = jax.block_until_ready(out)

    ref = _reference_forward(query, key, W, b)
    assert out.shape == (BATCH, N_KEYS), out.shape
    assert jnp.allclose(out, ref, atol=1e-5, rtol=1e-5), "mismatch vs reference"
    # Rows should sum to 1 (it is a softmax over n_keys).
    assert jnp.allclose(jnp.sum(out, axis=1), jnp.ones((BATCH,)), atol=1e-5)

    print("KERNEL_OK")
</pallas_src>

<mosaic_0001>
module attributes {stable_mosaic.version = 11 : i64} {
  func.func @_bilinear_max_attn_kernel(%arg0: i32, %arg1: memref<4x32xf32, #tpu.memory_space<vmem>>, %arg2: memref<48x32xf32, #tpu.memory_space<vmem>>, %arg3: memref<1x48xf32, #tpu.memory_space<vmem>>, %arg4: memref<16x48xf32, #tpu.memory_space<vmem>>, %arg5: memref<4x16xf32, #tpu.memory_space<vmem>>) attributes {dimension_semantics = [#tpu.dimension_semantics<parallel>], iteration_bounds = array<i64: 1>, scalar_prefetch = 0 : i64, scratch_operands = 0 : i64, tpu.core_type = #tpu.core_type<tc>, window_params = [{transform_indices = @transform_0, window_bounds = array<i64: 4, 32>}, {pipeline_mode = #tpu.pipeline_mode<synchronous>, transform_indices = @transform_1, window_bounds = array<i64: 48, 32>}, {pipeline_mode = #tpu.pipeline_mode<synchronous>, transform_indices = @transform_2, window_bounds = array<i64: 1, 48>}, {pipeline_mode = #tpu.pipeline_mode<synchronous>, transform_indices = @transform_3, window_bounds = array<i64: 16, 48>}, {transform_indices = @transform_4, window_bounds = array<i64: 4, 16>}]} {
    %c0 = arith.constant 0 : index
    %c0_0 = arith.constant 0 : index
    %0 = vector.load %arg1[%c0, %c0_0] : memref<4x32xf32, #tpu.memory_space<vmem>>, vector<4x32xf32>
    %c0_1 = arith.constant 0 : index
    %c0_2 = arith.constant 0 : index
    %1 = vector.load %arg2[%c0_1, %c0_2] : memref<48x32xf32, #tpu.memory_space<vmem>>, vector<48x32xf32>
    %cst = arith.constant dense<0.000000e+00> : vector<4x48xf32>
    %2 = tpu.matmul %0, %1, %cst {dimension_numbers = #tpu.dot_dimension_numbers<[1], [1], [0], [0], [0, 0, 1, 0], [], []>} : vector<4x32xf32>, vector<48x32xf32>, vector<4x48xf32> -> vector<4x48xf32>
    %c0_3 = arith.constant 0 : index
    %c0_4 = arith.constant 0 : index
    %3 = vector.load %arg3[%c0_3, %c0_4] : memref<1x48xf32, #tpu.memory_space<vmem>>, vector<1x48xf32>
    %4 = vector.broadcast %3 : vector<1x48xf32> to vector<4x48xf32>
    %5 = arith.addf %2, %4 : vector<4x48xf32>
    %c0_5 = arith.constant 0 : index
    %c0_6 = arith.constant 0 : index
    %6 = vector.load %arg4[%c0_5, %c0_6] : memref<16x48xf32, #tpu.memory_space<vmem>>, vector<16x48xf32>
    %cst_7 = arith.constant dense<0.000000e+00> : vector<4x16xf32>
    %7 = tpu.matmul %5, %6, %cst_7 {dimension_numbers = #tpu.dot_dimension_numbers<[1], [1], [0], [0], [0, 0, 1, 0], [], []>} : vector<4x48xf32>, vector<16x48xf32>, vector<4x16xf32> -> vector<4x16xf32>
    %8 = math.exp %7 : vector<4x16xf32>
    %cst_8 = arith.constant dense<0xFF800000> : vector<4xf32>
    %9 = vector.multi_reduction <maximumf>, %8, %cst_8 [1] : vector<4x16xf32> to vector<4xf32>
    %10 = vector.shape_cast %9 : vector<4xf32> to vector<4x1xf32>
    %11 = vector.broadcast %10 : vector<4x1xf32> to vector<4x16xf32>
    %12 = arith.divf %8, %11 : vector<4x16xf32>
    %cst_9 = arith.constant dense<0.000000e+00> : vector<4xf32>
    %13 = vector.multi_reduction <add>, %12, %cst_9 [1] : vector<4x16xf32> to vector<4xf32>
    %14 = vector.shape_cast %13 : vector<4xf32> to vector<4x1xf32>
    %15 = vector.broadcast %14 : vector<4x1xf32> to vector<4x16xf32>
    %16 = arith.divf %12, %15 : vector<4x16xf32>
    %c0_10 = arith.constant 0 : index
    %c0_11 = arith.constant 0 : index
    %17 = vector.load %arg5[%c0_10, %c0_11] : memref<4x16xf32, #tpu.memory_space<vmem>>, vector<4x16xf32>
    tpu.vector_store %arg5[%c0_10, %c0_11], %16 {strides = array<i32>} : memref<4x16xf32, #tpu.memory_space<vmem>>, vector<4x16xf32>,
    return
  }
  func.func @transform_0(%arg0: i32) -> (i32, i32) {
    %c0_i32 = arith.constant 0 : i32
    %c0_i32_0 = arith.constant 0 : i32
    return %arg0, %c0_i32 : i32, i32
  }
  func.func @transform_1(%arg0: i32) -> (i32, i32) {
    %c0_i32 = arith.constant 0 : i32
    %c0_i32_0 = arith.constant 0 : i32
    %c0_i32_1 = arith.constant 0 : i32
    return %c0_i32, %c0_i32_0 : i32, i32
  }
  func.func @transform_2(%arg0: i32) -> (i32, i32) {
    %c0_i32 = arith.constant 0 : i32
    %c0_i32_0 = arith.constant 0 : i32
    %c0_i32_1 = arith.constant 0 : i32
    return %c0_i32, %c0_i32_0 : i32, i32
  }
  func.func @transform_3(%arg0: i32) -> (i32, i32) {
    %c0_i32 = arith.constant 0 : i32
    %c0_i32_0 = arith.constant 0 : i32
    %c0_i32_1 = arith.constant 0 : i32
    return %c0_i32, %c0_i32_0 : i32, i32
  }
  func.func @transform_4(%arg0: i32) -> (i32, i32) {
    %c0_i32 = arith.constant 0 : i32
    %c0_i32_0 = arith.constant 0 : i32
    return %arg0, %c0_i32 : i32, i32
  }
}

</mosaic_0001>

<llo_original>
// kernel: bilinear_max_attn_forward.1
$region0: #{bilinear_max_attn_forward.1}
  #allocation0 [shape = 'u32[]', space=smem, size = 0x4, offset = 0x4, fixed_abs, tag = 'smem constant byte address 0x4 - core index']
  #allocation1 [shape = 'u32[144,128]{1,0:T(1,128)}', space=vmem, size = 0x12000, scoped, tag = 'internal scratch']
  %s0 = inlined_call_operand.vmem [shape: f32[4,32], index: 0, kind: input, shape index: {}]
  %s1 = inlined_call_operand.vmem [shape: f32[48,32], index: 1, kind: input, shape index: {}]
  %s2 = inlined_call_operand.vmem [shape: f32[1,48], index: 2, kind: input, shape index: {}]
  %s3 = inlined_call_operand.vmem [shape: f32[16,48], index: 3, kind: input, shape index: {}]
  %s4 = inlined_call_operand.hbm [shape: f32[4,16], index: 4, kind: output, shape index: {}]
  %s5 = sld [smem:[#allocation0]]
  $region26: #{bilinear_max_attn_forward.1} parent=0
    _
  %s7 = ssub.s32 1, %s5
  %s8 = scalar_select 0, %s7, %s5
  $region1: #{bilinear_max_attn_forward.1} parent=0
    #allocation2 [shape = 'u8[2048]{0}', space=vmem, size = 0x800, scoped, tag = 'output window, operand 0, single buffered']
    #allocation3 [shape = 's32[1]{0}', space=sflag, size = 0x4, scoped, tag = 'scoped memory for bilinear_max_attn_forward.1']
    %9 = vsyncpa [#allocation3], 0
    // Predicated region
    $region2: #{bilinear_max_attn_forward.1} parent=1 // pred_check
      _
    $region3: #{bilinear_max_attn_forward.1} parent=1 // pred_check_branch
      %11 = sbr.rel (0) target = $region5
    $region4: #{bilinear_max_attn_forward.1} parent=1 // pred_region
      _
    $region5: #{bilinear_max_attn_forward.1} parent=1 // pred_fallthru
      _
    // Predicated region
    $region6: #{bilinear_max_attn_forward.1} parent=1 // pred_check
      _
    $region7: #{bilinear_max_attn_forward.1} parent=1 // pred_check_branch
      %13 = sbr.rel (0) target = $region9
    $region8: #{bilinear_max_attn_forward.1} parent=1 // pred_region
      _
    $region9: #{bilinear_max_attn_forward.1} parent=1 // pred_fallthru
      _
    // Predicated region
    $region10: #{bilinear_max_attn_forward.1} parent=1 // pred_check
      _
    $region11: #{bilinear_max_attn_forward.1} parent=1 // pred_check_branch
      %15 = sbr.rel (0) target = $region13
    $region12: #{bilinear_max_attn_forward.1} parent=1 // pred_region
      _
    $region13: #{bilinear_max_attn_forward.1} parent=1 // pred_fallthru
      _
    // Predicated region
    $region14: #{bilinear_max_attn_forward.1} parent=1 // pred_check
      _
    $region15: #{bilinear_max_attn_forward.1} parent=1 // pred_check_branch
      %17 = sbr.rel (0) target = $region17
    $region16: #{bilinear_max_attn_forward.1} parent=1 // pred_region
      _
    $region17: #{bilinear_max_attn_forward.1} parent=1 // pred_fallthru
      _
    %v18 = vld [vmem:[%s0] sm:$0xf]
    %v19 = vld [vmem:[%s1] sm:$0xff]
    %v20 = vld [vmem:[%s1 + $0x8] sm:$0xff]
    %v21 = vld [vmem:[%s1 + $0x10] sm:$0xff]
    %v22 = vld [vmem:[%s1 + $0x18] sm:$0xff]
    %v23 = vld [vmem:[%s1 + $0x20] sm:$0xff]
    %v24 = vld [vmem:[%s1 + $0x28] sm:$0xff]
    %v25 = vld [vmem:[%s2] sm:$0x1]
    %v27 = vlaneseq
    %v28 = vshrl.u32 %v27, 7
    %v29 = vsub.s32 0, %v28
    %v30 = vrot.slane %v25, %v29
    %vm32 = vcmask 261120
    %v34 = vsel %vm32, %v18, 0
    %v37 = vsel %vm32, %v19, 0
    %v40 = vsel %vm32, %v20, 0
    %v43 = vsel %vm32, %v21, 0
    %v46 = vsel %vm32, %v22, 0
    %v49 = vsel %vm32, %v23, 0
    %v52 = vsel %vm32, %v24, 0
    %54 = vmatprep.subr.mxu0 0.0
    %55 = vmatpush1.xpose.msra.mxu0 %v37
    %56 = vmatprep.subr.mxu0 0.0
    %57 = vmatpush1.xpose.msra.mxu0 %v40
    %58 = vmatprep.subr.mxu0 0.0
    %59 = vmatpush1.xpose.msra.mxu0 %v43
    %60 = vmatprep.subr.mxu0 0.0
    %61 = vmatpush1.xpose.msra.mxu0 %v46
    %62 = vmatprep.subr.mxu0 0.0
    %63 = vmatpush1.xpose.msra.mxu0 %v49
    %64 = vmatprep.subr.mxu0 0.0
    %65 = vmatpush1.xpose.msra.mxu0 %v52
    %66 = vmatprep.subr.mxu0 0.0
    %67 = vmatpush1.xpose.msra.mxu0 0.0
    %68 = vmatprep.subr.mxu0 0.0
    %69 = vmatpush1.xpose.msra.mxu0 0.0
    %70 = vmatprep.subr.mxu0 0.0
    %71 = vmatpush1.xpose.msra.mxu0 0.0
    %72 = vmatprep.subr.mxu0 0.0
    %73 = vmatpush1.xpose.msra.mxu0 0.0
    %74 = vmatprep.subr.mxu0 0.0
    %75 = vmatpush1.xpose.msra.mxu0 0.0
    %76 = vmatprep.subr.mxu0 0.0
    %77 = vmatpush1.xpose.msra.mxu0 0.0
    %78 = vmatprep.subr.mxu0 0.0
    %79 = vmatpush1.xpose.msra.mxu0 0.0
    %80 = vmatprep.subr.mxu0 0.0
    %81 = vmatpush1.xpose.msra.mxu0 0.0
    %82 = vmatprep.subr.mxu0 0.0
    %83 = vmatpush1.xpose.msra.mxu0 0.0
    %84 = vmatprep.subr.mxu0 0.0
    %85 = vmatpush1.xpose.msra.mxu0 0.0
    %86 = vmatprep.subr.mxu0 0.0
    %87 = vmatpush1.xpose.msra.mxu0 0.0
    %88 = vmatprep.subr.mxu0 0.0
    %89 = vmatpush1.xpose.msra.mxu0 0.0
    %90 = vmatprep.subr.mxu0 0.0
    %91 = vmatpush1.xpose.msra.mxu0 0.0
    %92 = vmatprep.subr.mxu0 0.0
    %93 = vmatpush1.xpose.msra.mxu0 0.0
    %94 = vmatprep.subr.mxu0 0.0
    %95 = vmatpush1.xpose.msra.mxu0 0.0
    %96 = vmatprep.subr.mxu0 0.0
    %97 = vmatpush1.xpose.msra.mxu0 0.0
    %98 = vmatprep.subr.mxu0 0.0
    %99 = vmatpush1.xpose.msra.mxu0 0.0
    %100 = vmatprep.subr.mxu0 0.0
    %101 = vmatpush1.xpose.msra.mxu0 0.0
    %102 = vmatprep.subr.mxu0 0.0
    %103 = vmatpush1.xpose.msra.mxu0 0.0
    %104 = vmatprep.subr.mxu0 0.0
    %105 = vmatpush1.xpose.msra.mxu0 0.0
    %106 = vmatprep.subr.mxu0 0.0
    %107 = vmatpush1.xpose.msra.mxu0 0.0
    %108 = vmatprep.subr.mxu0 0.0
    %109 = vmatpush1.xpose.msra.mxu0 0.0
    %110 = vmatprep.subr.mxu0 0.0
    %111 = vmatpush1.xpose.msra.mxu0 0.0
    %112 = vmatprep.subr.mxu0 0.0
    %113 = vmatpush1.xpose.msra.mxu0 0.0
    %114 = vmatprep.subr.mxu0 0.0
    %115 = vmatpush1.xpose.msra.mxu0 0.0
    %116 = vmatprep.subr.mxu0 0.0
    %117 = vmatpush1.xpose.msra.mxu0 0.0
    %118 = vmatprep.mubr.f32.mxu0 0.0
    %119 = vmatmul.mubr.f32.gmra.mrb[0].mxu0 %v34
    %v120 = vpop.f32.mrb[0].mxu0
    %v121 = vadd.f32 %v30, %v120
    %v122 = vpop.f32.mrb[0].mxu0
    %123 = vdwg.mxu0
    %v124 = vld [vmem:[%s3] sm:$0xff]
    %v125 = vld [vmem:[%s3 + $0x8] sm:$0xff]
    %vm126 = vcmask 392192
    %v128 = vsel %vm126, %v121, 0
    %v131 = vsel %vm126, %v124, 0
    %v134 = vsel %vm126, %v125, 0
    %136 = vmatprep.subr.mxu0 0.0
    %137 = vmatpush1.xpose.msra.mxu0 %v131
    %138 = vmatprep.subr.mxu0 0.0
    %139 = vmatpush1.xpose.msra.mxu0 %v134
    %140 = vmatprep.subr.mxu0 0.0
    %141 = vmatpush1.xpose.msra.mxu0 0.0
    %142 = vmatprep.subr.mxu0 0.0
    %143 = vmatpush1.xpose.msra.mxu0 0.0
    %144 = vmatprep.subr.mxu0 0.0
    %145 = vmatpush1.xpose.msra.mxu0 0.0
    %146 = vmatprep.subr.mxu0 0.0
    %147 = vmatpush1.xpose.msra.mxu0 0.0
    %148 = vmatprep.subr.mxu0 0.0
    %149 = vmatpush1.xpose.msra.mxu0 0.0
    %150 = vmatprep.subr.mxu0 0.0
    %151 = vmatpush1.xpose.msra.mxu0 0.0
    %152 = vmatprep.subr.mxu0 0.0
    %153 = vmatpush1.xpose.msra.mxu0 0.0
    %154 = vmatprep.subr.mxu0 0.0
    %155 = vmatpush1.xpose.msra.mxu0 0.0
    %156 = vmatprep.subr.mxu0 0.0
    %157 = vmatpush1.xpose.msra.mxu0 0.0
    %158 = vmatprep.subr.mxu0 0.0
    %159 = vmatpush1.xpose.msra.mxu0 0.0
    %160 = vmatprep.subr.mxu0 0.0
    %161 = vmatpush1.xpose.msra.mxu0 0.0
    %162 = vmatprep.subr.mxu0 0.0
    %163 = vmatpush1.xpose.msra.mxu0 0.0
    %164 = vmatprep.subr.mxu0 0.0
    %165 = vmatpush1.xpose.msra.mxu0 0.0
    %166 = vmatprep.subr.mxu0 0.0
    %167 = vmatpush1.xpose.msra.mxu0 0.0
    %168 = vmatprep.subr.mxu0 0.0
    %169 = vmatpush1.xpose.msra.mxu0 0.0
    %170 = vmatprep.subr.mxu0 0.0
    %171 = vmatpush1.xpose.msra.mxu0 0.0
    %172 = vmatprep.subr.mxu0 0.0
    %173 = vmatpush1.xpose.msra.mxu0 0.0
    %174 = vmatprep.subr.mxu0 0.0
    %175 = vmatpush1.xpose.msra.mxu0 0.0
    %176 = vmatprep.subr.mxu0 0.0
    %177 = vmatpush1.xpose.msra.mxu0 0.0
    %178 = vmatprep.subr.mxu0 0.0
    %179 = vmatpush1.xpose.msra.mxu0 0.0
    %180 = vmatprep.subr.mxu0 0.0
    %181 = vmatpush1.xpose.msra.mxu0 0.0
    %182 = vmatprep.subr.mxu0 0.0
    %183 = vmatpush1.xpose.msra.mxu0 0.0
    %184 = vmatprep.subr.mxu0 0.0
    %185 = vmatpush1.xpose.msra.mxu0 0.0
    %186 = vmatprep.subr.mxu0 0.0
    %187 = vmatpush1.xpose.msra.mxu0 0.0
    %188 = vmatprep.subr.mxu0 0.0
    %189 = vmatpush1.xpose.msra.mxu0 0.0
    %190 = vmatprep.subr.mxu0 0.0
    %191 = vmatpush1.xpose.msra.mxu0 0.0
    %192 = vmatprep.subr.mxu0 0.0
    %193 = vmatpush1.xpose.msra.mxu0 0.0
    %194 = vmatprep.subr.mxu0 0.0
    %195 = vmatpush1.xpose.msra.mxu0 0.0
    %196 = vmatprep.subr.mxu0 0.0
    %197 = vmatpush1.xpose.msra.mxu0 0.0
    %198 = vmatprep.subr.mxu0 0.0
    %199 = vmatpush1.xpose.msra.mxu0 0.0
    %200 = vmatprep.mubr.f32.mxu0 0.0
    %201 = vmatmul.mubr.f32.gmra.mrb[0].mxu0 %v128
    %v202 = vpop.f32.mrb[0].mxu0
    %v203 = vadd.f32 0.0, %v202
    %v204 = vpop.f32.mrb[0].mxu0
    %205 = vdwg.mxu0
    %v206 = vmul.f32 %v203, 1.442695
    %v207 = vpow.pop %v206
    %vm208 = vcmask 125952
    %v209 = vsel %vm208, %v207, -inf
    %210 = vmax.xlane.f32.xlu0 %v209
    %v211 = vpop.xlane.xlu0 %210
    %v212 = vrcp.pop %v211
    %v213 = vmul.f32 %v207, %v212
    %v214 = vsel %vm208, %v213, 0.0
    %215 = vadd.xlane.f32.xlu0 %v214
    %v216 = vpop.xlane.xlu0 %215
    %v217 = vrcp.pop %v216
    %v218 = vmul.f32 %v213, %v217
    %219 = vst.msk [vmem:[#allocation2] sm:$0xf] %vm208, %v218
    // Predicated region
    $region18: #{bilinear_max_attn_forward.1} parent=1 // pred_check
      _
    $region19: #{bilinear_max_attn_forward.1} parent=1 // pred_check_branch
      %221 = sbr.rel (0) target = $region21
    $region20: #{bilinear_max_attn_forward.1} parent=1 // pred_region
      %s223 = ssub.s32 64, 64
      %224 = vsyncadd [#allocation3], %s223
      %s226 = sshll.u32 [#allocation2], 4
      %s227 = int_to_ptr.vmem [resolvable:$true] %s226
      %229 = dma.vmem_to_hbm [thread:$0]  %s227, 64, %s4, [#allocation3]
    $region21: #{bilinear_max_attn_forward.1} parent=1 // pred_fallthru
      _
    // Predicated region
    $region22: #{bilinear_max_attn_forward.1} parent=1 // pred_check
      _
    $region23: #{bilinear_max_attn_forward.1} parent=1 // pred_check_branch
      %231 = sbr.rel (0) target = $region25
    $region24: #{bilinear_max_attn_forward.1} parent=1 // pred_region
      %232 = dma.done [#allocation3], 64
    $region25: #{bilinear_max_attn_forward.1} parent=1 // pred_fallthru
      _
    %233 = vsyncpa [#allocation3], 1

</llo_original>
